<compile_context>
chip_gen: v5e
topology: v5e:2x2
jax: 0.10.0
libtpu: 0.0.40
codegen_flags: <defaults>
</compile_context>

<pallas_src>
import jax
import jax.numpy as jnp
import numpy as np
from jax.experimental import pallas as pl
from jax.experimental.pallas import tpu as pltpu  # noqa: F401  (TPU backend / tuning hooks)

# ---- module hyper-parameters (small, consistent with the PyTorch module) ----
B_BITS = 4                   # B: bits per quantized value
BATCH = 2
N_FEAT = 32                  # x.shape[1]
OUT_FEAT = N_FEAT * B_BITS   # 128 -> lane-dense output


def _quant_bits_kernel(x_ref, e_ref, o_ref):
    step = jnp.float32(2.0 ** B_BITS - 1e-6)

    # 1) uniform quantization: round(x * step - 0.5).
    #    torch.round and jnp.round both round half-to-even -> bit-exact match.
    num = jnp.round(x_ref[...] * step - 0.5)                  # integer-valued f32, (b, n)
    # TODO(synk): PyTorch's `.type(torch.uint8)` wraps out-of-range values mod 256;
    # this layer's inputs are in [0, 1) (quantizer domain), so the wrap path is not emulated.

    # 2) one tiny MXU dot against the constant expansion matrix
    #       E[i, i*B + k] = 2^-(B-1-k)   (MSB first), 0 elsewhere
    #    replicates each quantized number into its B output lanes, already divided by
    #    the per-bit power of two.
    scaled = jnp.dot(num, e_ref[...], preferred_element_type=jnp.float32)   # (b, n*B)

    # 3) bit = floor(num / 2^shift) mod 2, entirely in exact f32 VPU math.
    f = jnp.floor(scaled)
    o_ref[...] = f - 2.0 * jnp.floor(f * 0.5)                 # {0.0, 1.0}, lane-dense store


def _expansion_matrix(n, b_bits):
    """Constant (n, n*b_bits) matrix: E[i, i*B + k] = 2^-(B-1-k), else 0."""
    e = np.zeros((n, n * b_bits), np.float32)
    for i in range(n):
        for k in range(b_bits):
            e[i, i * b_bits + k] = 2.0 ** (-(b_bits - 1 - k))
    return jnp.asarray(e)


def quantization_forward(x):
    """QuantizationLayer(B=B_BITS).forward for x of shape (batch, N) with values in [0, 1)."""
    b, n = x.shape
    expand = _expansion_matrix(n, B_BITS)                     # trace-time constant, ~16 KB
    return pl.pallas_call(
        _quant_bits_kernel,
        out_shape=jax.ShapeDtypeStruct((b, n * B_BITS), jnp.float32),
        # no grid / BlockSpecs: whole (b, n) input, (n, n*B) constant and (b, n*B) output
        # live comfortably in VMEM as single full blocks.
    )(x.astype(jnp.float32), expand)


if __name__ == "__main__":
    key = jax.random.PRNGKey(0)
    x = jax.random.uniform(key, (BATCH, N_FEAT), dtype=jnp.float32)   # quantizer domain [0, 1)

    out = quantization_forward(x)
    jax.block_until_ready(out)

    # pure-JAX reference of Quantization.forward / Num2Bit
    step = 2.0 ** B_BITS - 1e-6
    num_ref = jnp.round(x * step - 0.5).astype(jnp.int32)
    exps = (B_BITS - 1) - jnp.arange(B_BITS, dtype=jnp.int32)          # MSB first
    ref = ((num_ref[..., None] // (2 ** exps)) % 2).reshape(BATCH, OUT_FEAT).astype(jnp.float32)

    assert out.shape == (BATCH, OUT_FEAT), out.shape
    assert out.dtype == jnp.float32, out.dtype
    assert bool(jnp.all((out == 0.0) | (out == 1.0)))
    assert bool(jnp.array_equal(out, ref)), "mismatch vs. reference Num2Bit"
    print("KERNEL_OK")
</pallas_src>

<mosaic_0001>
module attributes {stable_mosaic.version = 11 : i64} {
  func.func @_quant_bits_kernel(%arg0: memref<2x32xf32, #tpu.memory_space<vmem>>, %arg1: memref<32x128xf32, #tpu.memory_space<vmem>>, %arg2: memref<2x128xf32, #tpu.memory_space<vmem>>) attributes {dimension_semantics = [], scalar_prefetch = 0 : i64, scratch_operands = 0 : i64, tpu.core_type = #tpu.core_type<tc>} {
    %c0 = arith.constant 0 : index
    %c0_0 = arith.constant 0 : index
    %0 = vector.load %arg0[%c0, %c0_0] : memref<2x32xf32, #tpu.memory_space<vmem>>, vector<2x32xf32>
    %cst = arith.constant 15.999999 : f32
    %1 = vector.broadcast %cst : f32 to vector<2x32xf32>
    %2 = arith.mulf %0, %1 : vector<2x32xf32>
    %cst_1 = arith.constant 5.000000e-01 : f32
    %3 = vector.broadcast %cst_1 : f32 to vector<2x32xf32>
    %4 = arith.subf %2, %3 : vector<2x32xf32>
    %5 = math.roundeven %4 : vector<2x32xf32>
    %c0_2 = arith.constant 0 : index
    %c0_3 = arith.constant 0 : index
    %6 = vector.load %arg1[%c0_2, %c0_3] : memref<32x128xf32, #tpu.memory_space<vmem>>, vector<32x128xf32>
    %cst_4 = arith.constant dense<0.000000e+00> : vector<2x128xf32>
    %7 = tpu.matmul %5, %6, %cst_4 {dimension_numbers = #tpu.dot_dimension_numbers<[1], [0], [0], [1], [0, 0, 1, 1], [], []>} : vector<2x32xf32>, vector<32x128xf32>, vector<2x128xf32> -> vector<2x128xf32>
    %8 = math.floor %7 : vector<2x128xf32>
    %cst_5 = arith.constant 5.000000e-01 : f32
    %9 = vector.broadcast %cst_5 : f32 to vector<2x128xf32>
    %10 = arith.mulf %8, %9 : vector<2x128xf32>
    %11 = math.floor %10 : vector<2x128xf32>
    %cst_6 = arith.constant 2.000000e+00 : f32
    %12 = vector.broadcast %cst_6 : f32 to vector<2x128xf32>
    %13 = arith.mulf %12, %11 : vector<2x128xf32>
    %14 = arith.subf %8, %13 : vector<2x128xf32>
    %c0_7 = arith.constant 0 : index
    %c0_8 = arith.constant 0 : index
    %15 = vector.load %arg2[%c0_7, %c0_8] : memref<2x128xf32, #tpu.memory_space<vmem>>, vector<2x128xf32>
    tpu.vector_store %arg2[%c0_7, %c0_8], %14 {strides = array<i32>} : memref<2x128xf32, #tpu.memory_space<vmem>>, vector<2x128xf32>,
    return
  }
}

</mosaic_0001>

<llo_original>
// kernel: tpu_custom_call.1
$region0: #{tpu_custom_call.1}
  #allocation0 [shape = 'u32[]', space=smem, size = 0x4, offset = 0x4, fixed_abs, tag = 'smem constant byte address 0x4 - core index']
  #allocation1 [shape = 'u32[72,128]{1,0:T(1,128)}', space=vmem, size = 0x9000, scoped, tag = 'internal scratch']
  %s0 = inlined_call_operand.hbm [shape: f32[2,32], index: 0, kind: input, shape index: {}]
  %s1 = inlined_call_operand.hbm [shape: f32[32,128], index: 1, kind: input, shape index: {}]
  %s2 = inlined_call_operand.hbm [shape: f32[2,128], index: 2, kind: output, shape index: {}]
  %s3 = sld [smem:[#allocation0]]
  $region26: #{tpu_custom_call.1} parent=0
    _
  %s5 = ssub.s32 1, %s3
  %s6 = scalar_select 0, %s5, %s3
  $region1: #{tpu_custom_call.1} parent=0
    #allocation2 [shape = 'u8[1024]{0}', space=vmem, size = 0x400, scoped, tag = 'input window, operand 0, single buffered']
    #allocation3 [shape = 's32[1]{0}', space=sflag, size = 0x4, scoped, tag = 'scoped memory for tpu_custom_call.1']
    #allocation4 [shape = 's32[1]{0}', space=sflag, size = 0x4, scoped, tag = 'scoped memory for tpu_custom_call.1']
    #allocation5 [shape = 'u8[16384]{0}', space=vmem, size = 0x4000, scoped, tag = 'input window, operand 1, single buffered']
    #allocation6 [shape = 's32[1]{0}', space=sflag, size = 0x4, scoped, tag = 'scoped memory for tpu_custom_call.1']
    #allocation7 [shape = 'u8[1024]{0}', space=vmem, size = 0x400, scoped, tag = 'output window, operand 0, single buffered']
    %7 = vsyncpa [#allocation3], 0
    %8 = vsyncpa [#allocation6], 0
    %9 = vsyncpa [#allocation4], 0
    // Predicated region
    $region2: #{tpu_custom_call.1} parent=1 // pred_check
      _
    $region3: #{tpu_custom_call.1} parent=1 // pred_check_branch
      %11 = sbr.rel (0) target = $region5
    $region4: #{tpu_custom_call.1} parent=1 // pred_region
      %13 = vsyncadd [#allocation3], 0
      %s15 = sshll.u32 %s0, 4
      %s16 = int_to_ptr.hbm [resolvable:$true] %s15
      %s17 = sshll.u32 [#allocation2], 4
      %s18 = int_to_ptr.vmem [resolvable:$true] %s17
      %20 = dma.hbm_to_vmem [thread:$0]  %s16, 32, %s18, [#allocation3]
    $region5: #{tpu_custom_call.1} parent=1 // pred_fallthru
      _
    // Predicated region
    $region6: #{tpu_custom_call.1} parent=1 // pred_check
      _
    $region7: #{tpu_custom_call.1} parent=1 // pred_check_branch
      %22 = sbr.rel (0) target = $region9
    $region8: #{tpu_custom_call.1} parent=1 // pred_region
      %24 = vsyncadd [#allocation6], 0
      %s25 = sshll.u32 %s1, 4
      %s26 = int_to_ptr.hbm [resolvable:$true] %s25
      %s27 = sshll.u32 [#allocation5], 4
      %s28 = int_to_ptr.vmem [resolvable:$true] %s27
      %33 = dma.hbm_to_vmem [thread:$0]  %s26, 512, %s28, [#allocation6], 128, 128, 8
    $region9: #{tpu_custom_call.1} parent=1 // pred_fallthru
      _
    // Predicated region
    $region10: #{tpu_custom_call.1} parent=1 // pred_check
      _
    $region11: #{tpu_custom_call.1} parent=1 // pred_check_branch
      %35 = sbr.rel (0) target = $region13
    $region12: #{tpu_custom_call.1} parent=1 // pred_region
      %37 = dma.done [#allocation3], 32
    $region13: #{tpu_custom_call.1} parent=1 // pred_fallthru
      _
    // Predicated region
    $region14: #{tpu_custom_call.1} parent=1 // pred_check
      _
    $region15: #{tpu_custom_call.1} parent=1 // pred_check_branch
      %39 = sbr.rel (0) target = $region17
    $region16: #{tpu_custom_call.1} parent=1 // pred_region
      %41 = dma.done [#allocation6], 512
    $region17: #{tpu_custom_call.1} parent=1 // pred_fallthru
      _
    %v42 = vld [vmem:[#allocation2] sm:$0x3]
    %v43 = vmul.f32 %v42, 15.999999
    %v44 = vsub.f32 %v43, 0.5
    %v45 = vround.ne.pseudo %v44
    %v46 = vld [vmem:[#allocation5] sm:$0xff]
    %v47 = vld [vmem:[#allocation5 + $0x8] sm:$0xff]
    %v48 = vld [vmem:[#allocation5 + $0x10] sm:$0xff]
    %v49 = vld [vmem:[#allocation5 + $0x18] sm:$0xff]
    %vm50 = vcmask 261120
    %v52 = vsel %vm50, %v45, 0
    %54 = vmatpush.msra.mxu0 0.0
    %55 = vmatpush.msra.mxu0 0.0
    %56 = vmatpush.msra.mxu0 0.0
    %57 = vmatpush.msra.mxu0 0.0
    %58 = vmatpush.msra.mxu0 0.0
    %59 = vmatpush.msra.mxu0 0.0
    %60 = vmatpush.msra.mxu0 0.0
    %61 = vmatpush.msra.mxu0 0.0
    %62 = vmatpush.msra.mxu0 0.0
    %63 = vmatpush.msra.mxu0 0.0
    %64 = vmatpush.msra.mxu0 0.0
    %65 = vmatpush.msra.mxu0 0.0
    %66 = vmatpush.msra.mxu0 %v49
    %67 = vmatpush.msra.mxu0 %v48
    %68 = vmatpush.msra.mxu0 %v47
    %69 = vmatpush.msra.mxu0 %v46
    %70 = vmatmul.f32.gmra.mxu0 %v52
    %v71 = vpop.f32.mrf.mxu0
    %v72 = vadd.f32 0.0, %v71
    %73 = vdwg.mxu0
    %v74 = vfloor.f32 %v72
    %v75 = vmul.f32 %v74, 0.5
    %v76 = vfloor.f32 %v75
    %v77 = vmul.f32 %v76, 2.0
    %v78 = vsub.f32 %v74, %v77
    %79 = vst [vmem:[#allocation7] sm:$0x3] %v78
    // Predicated region
    $region18: #{tpu_custom_call.1} parent=1 // pred_check
      _
    $region19: #{tpu_custom_call.1} parent=1 // pred_check_branch
      %81 = sbr.rel (0) target = $region21
    $region20: #{tpu_custom_call.1} parent=1 // pred_region
      %83 = vsyncadd [#allocation4], 0
      %s85 = sshll.u32 [#allocation7], 4
      %s86 = int_to_ptr.vmem [resolvable:$true] %s85
      %s87 = sshll.u32 %s2, 4
      %s88 = int_to_ptr.hbm [resolvable:$true] %s87
      %90 = dma.vmem_to_hbm [thread:$0]  %s86, 32, %s88, [#allocation4]
    $region21: #{tpu_custom_call.1} parent=1 // pred_fallthru
      _
    // Predicated region
    $region22: #{tpu_custom_call.1} parent=1 // pred_check
      _
    $region23: #{tpu_custom_call.1} parent=1 // pred_check_branch
      %92 = sbr.rel (0) target = $region25
    $region24: #{tpu_custom_call.1} parent=1 // pred_region
      %94 = dma.done [#allocation4], 32
    $region25: #{tpu_custom_call.1} parent=1 // pred_fallthru
      _
    %95 = vsyncpa [#allocation3], 1
    %96 = vsyncpa [#allocation6], 1
    %97 = vsyncpa [#allocation4], 1

</llo_original>
